<compile_context>
chip_gen: v7x
topology: tpu7x:2x2x1
jax: 0.10.0
libtpu: 0.0.40
codegen_flags: <defaults>
</compile_context>

<pallas_src>
import functools

import jax
import jax.numpy as jnp
from jax import lax
from jax.experimental import pallas as pl
from jax.experimental.pallas import tpu as pltpu


# ----------------------------- shared kernel pieces --------------------------
def _fc3_row(h, slab_ref, h2):
    """fc3 emitted lane-dense: (8, H2) x (TB, H2) contracted on H2 -> take row 0 -> (1, TB).

    The w3 row is sublane-broadcast to a full 8-row tile so the MXU never sees an M=1 operand;
    the extra 7 rows are negligible work and are discarded with a static sublane slice.
    """
    w3 = jnp.broadcast_to(slab_ref[1:2, :h2], (8, h2)).astype(jnp.bfloat16)
    y = lax.dot_general(w3, h.astype(jnp.bfloat16),
                        dimension_numbers=(((1,), (1,)), ((), ())),
                        preferred_element_type=jnp.float32)          # (8, TB), rows identical
    return y[0:1, :] + slab_ref[2:3, 0:1]                            # + b3 -> (1, TB)


def _fc2_fc3(xs, action, w2_ref, slab_ref, h1, h2):
    """relu(fc2(concat(xs, action))) then fc3, returning a lane-dense (1, TB) row."""
    # fc2(concat(xs, a)) == xs @ W2[:, :H1].T + a @ W2[:, H1:].T + b2  (split matmul, whole w2;
    # the [:h1] slice is sublane-aligned, the [h1:] slice is a small K=C_out partial tile).
    h = (jnp.dot(xs.astype(jnp.bfloat16), w2_ref[:h1, :],
                 preferred_element_type=jnp.float32)
         + jnp.dot(action.astype(jnp.bfloat16), w2_ref[h1:, :],
                   preferred_element_type=jnp.float32)
         + slab_ref[0:1, :h2])
    h = jnp.maximum(h, 0.0)                                          # relu (f32, VPU)
    return _fc3_row(h, slab_ref, h2)


# ----------------------------- single-block fused kernel ---------------------
def _fused_kernel(state_ref, action_ref, w1_ref, w2_ref, slab_ref, out_ref, *, h1, h2, inv_b):
    # fc1 WITHOUT bias: training-mode BN's batch-mean subtraction cancels it exactly.
    z1 = jnp.dot(state_ref[...].astype(jnp.bfloat16), w1_ref[...],
                 preferred_element_type=jnp.float32)                 # [B, H1]
    # Single-pass batch statistics (biased variance), affine folded into scale/shift.
    s = jnp.sum(z1, axis=0, keepdims=True)
    ss = jnp.sum(z1 * z1, axis=0, keepdims=True)
    mean = s * inv_b
    var = ss * inv_b - mean * mean
    scale = slab_ref[3:4, :h1] * lax.rsqrt(var + 1e-5)               # gamma * rsqrt  (EUP)
    shift = slab_ref[4:5, :h1] - mean * scale                        # beta - mean*scale
    xs = jnp.maximum(z1 * scale + shift, 0.0)                        # relu (f32, VPU)
    out_ref[...] = _fc2_fc3(xs, action_ref[...], w2_ref, slab_ref, h1, h2)


# ----------------------------- two-pass tiled kernels ------------------------
def _stats_kernel(state_ref, w1_ref, slab_ref, stats_ref, sum_ref, ssq_ref, *, h1, inv_b):
    """Pass 1: accumulate per-feature sum/sumsq of fc1 over batch tiles; emit scale/shift."""
    i = pl.program_id(0)

    @pl.when(i == 0)
    def _():
        sum_ref[...] = jnp.zeros_like(sum_ref)
        ssq_ref[...] = jnp.zeros_like(ssq_ref)

    z1 = jnp.dot(state_ref[...].astype(jnp.bfloat16), w1_ref[...],
                 preferred_element_type=jnp.float32)                 # [TB, H1]
    sum_ref[...] += jnp.sum(z1, axis=0, keepdims=True)
    ssq_ref[...] += jnp.sum(z1 * z1, axis=0, keepdims=True)

    @pl.when(i == pl.num_programs(0) - 1)
    def _():
        mean = sum_ref[...] * inv_b
        var = ssq_ref[...] * inv_b - mean * mean
        scale = slab_ref[3:4, :h1] * lax.rsqrt(var + 1e-5)
        shift = slab_ref[4:5, :h1] - mean * scale
        stats_ref[...] = jnp.concatenate([scale, shift], axis=0)     # [2, H1]


def _tile_kernel(state_ref, action_ref, stats_ref, w1_ref, w2_ref, slab_ref, out_ref, *, h1, h2):
    """Pass 2: per-tile fc1 -> folded BN -> fc2 -> fc3 (tiles independent -> parallel axis)."""
    z1 = jnp.dot(state_ref[...].astype(jnp.bfloat16), w1_ref[...],
                 preferred_element_type=jnp.float32)                 # fc1 recomputed per tile
    xs = jnp.maximum(z1 * stats_ref[0:1, :] + stats_ref[1:2, :], 0.0)
    out_ref[...] = _fc2_fc3(xs, action_ref[...], w2_ref, slab_ref, h1, h2)


# ------------------------------ JAX wrapper ----------------------------------
def _pick_block(b):
    """Batch tile size; the multi-tile path needs TB % 128 == 0 (lane-dense output blocks)."""
    if b < 256 or b % 128 != 0:
        return b                       # single fused block
    # ~1 KB of f32 intermediates per row -> 1024-row tiles are a few MiB, comfortably inside
    # v7x's 32 MiB scoped-VMEM default even double-buffered (and trivially on v5e/v6e).
    for tb in (1024, 512, 256, 128):
        if b % tb == 0 and b // tb >= 2:
            return tb
    return b


@jax.jit
def critic_forward(state, action, w1_bf, w2_bf, slab):
    """state: [B, C_in] f32, action: [B, C_out] f32 -> [B, 1] f32 (training-mode BatchNorm)."""
    B, c_in = state.shape
    c_out = action.shape[1]
    h1 = w1_bf.shape[1]
    h2 = w2_bf.shape[1]
    tb = _pick_block(B)

    full = lambda a: pl.BlockSpec(a.shape, lambda *_: (0,) * a.ndim)

    if tb >= B:
        # Small / ragged batch: one fused kernel, BN statistics computed in-register.
        out = pl.pallas_call(
            functools.partial(_fused_kernel, h1=h1, h2=h2, inv_b=1.0 / B),
            out_shape=jax.ShapeDtypeStruct((1, B), jnp.float32),
            in_specs=[full(state), full(action), full(w1_bf), full(w2_bf), full(slab)],
            out_specs=pl.BlockSpec((1, B), lambda: (0, 0)),
        )(state, action, w1_bf, w2_bf, slab)
        return out.reshape(B, 1)       # (1,B) -> (B,1) is a free bitcast in the wrapper

    num_tiles = B // tb

    # Pass 1: batch-tiled fc1 + sum/sumsq reduction -> folded BN scale/shift ([2, H1]).
    stats = pl.pallas_call(
        functools.partial(_stats_kernel, h1=h1, inv_b=1.0 / B),
        out_shape=jax.ShapeDtypeStruct((2, h1), jnp.float32),
        grid_spec=pltpu.PrefetchScalarGridSpec(
            num_scalar_prefetch=0,
            grid=(num_tiles,),
            in_specs=[pl.BlockSpec((tb, c_in), lambda i: (i, 0)),
                      full(w1_bf), full(slab)],
            out_specs=pl.BlockSpec((2, h1), lambda i: (0, 0)),
            scratch_shapes=[pltpu.VMEM((1, h1), jnp.float32)] * 2),
        compiler_params=pltpu.CompilerParams(dimension_semantics=("arbitrary",)),
    )(state, w1_bf, slab)

    # Pass 2: tiles are independent -> "parallel" so both v7x TensorCores are used.
    # Weights/stats/slab have constant index_maps -> stay resident, not re-DMA'd per tile.
    out = pl.pallas_call(
        functools.partial(_tile_kernel, h1=h1, h2=h2),
        out_shape=jax.ShapeDtypeStruct((1, B), jnp.float32),
        grid_spec=pltpu.PrefetchScalarGridSpec(
            num_scalar_prefetch=0,
            grid=(num_tiles,),
            in_specs=[pl.BlockSpec((tb, c_in), lambda i: (i, 0)),
                      pl.BlockSpec((tb, c_out), lambda i: (i, 0)),
                      full(stats), full(w1_bf), full(w2_bf), full(slab)],
            out_specs=pl.BlockSpec((1, tb), lambda i: (0, i)),       # lane-dense output blocks
        ),
        compiler_params=pltpu.CompilerParams(dimension_semantics=("parallel",)),
    )(state, action, stats, w1_bf, w2_bf, slab)
    return out.reshape(B, 1)


# ------------------------- parameter construction ----------------------------
def init_params(key, in_channels, out_channels, hidden_layers=(64, 64)):
    """PyTorch-style parameters (matching CriticNetwork.reset_params / module defaults)."""
    h1, h2 = hidden_layers
    ks = jax.random.split(key, 6)

    def uni(k, shape, lim):
        return jax.random.uniform(k, shape, jnp.float32, minval=-lim, maxval=lim)

    return dict(
        # fc1/fc2: reset_params uses lim = 1/sqrt(weight.size(0)) = 1/sqrt(fan_out)
        w1=uni(ks[0], (h1, in_channels), 1.0 / (h1 ** 0.5)),
        b1=uni(ks[1], (h1,), 1.0 / (in_channels ** 0.5)),            # PyTorch default bias init
        gamma=jnp.ones((h1,), jnp.float32),                          # BatchNorm1d defaults
        beta=jnp.zeros((h1,), jnp.float32),
        w2=uni(ks[2], (h2, h1 + out_channels), 1.0 / (h2 ** 0.5)),
        b2=uni(ks[3], (h2,), 1.0 / ((h1 + out_channels) ** 0.5)),
        w3=uni(ks[4], (1, h2), 0.003),
        b3=uni(ks[5], (1,), 1.0 / (h2 ** 0.5)),
    )


def pack_params(p):
    """Kernel layout: bf16 transposed matmul weights + one (8, 128k) f32 slab of small vectors."""
    h1 = p["w1"].shape[0]
    h2 = p["w2"].shape[0]
    w1_bf = p["w1"].T.astype(jnp.bfloat16)           # [C_in, H1]        (MXU operand)
    w2_bf = p["w2"].T.astype(jnp.bfloat16)           # [H1 + C_out, H2]  (MXU operand)

    width = ((max(h1, h2, 1) + 127) // 128) * 128    # lane-pad once, on the host
    slab = jnp.zeros((8, width), jnp.float32)
    slab = slab.at[0, :h2].set(p["b2"])
    slab = slab.at[1, :h2].set(p["w3"][0])
    slab = slab.at[2, 0].set(p["b3"][0])
    slab = slab.at[3, :h1].set(p["gamma"])
    slab = slab.at[4, :h1].set(p["beta"])
    # b1 intentionally NOT packed: training-mode BatchNorm cancels it (see kernel comments).
    return w1_bf, w2_bf, slab


# ---------------------------- pure-JAX reference ------------------------------
def critic_ref(state, action, p):
    """Faithful f32 PyTorch-semantics reference (keeps the fc1 bias to prove BN cancellation)."""
    z1 = state @ p["w1"].T + p["b1"]
    mean = jnp.mean(z1, axis=0, keepdims=True)
    var = jnp.mean((z1 - mean) ** 2, axis=0, keepdims=True)
    xs = jnp.maximum((z1 - mean) / jnp.sqrt(var + 1e-5) * p["gamma"] + p["beta"], 0.0)
    x = jnp.concatenate([xs, action], axis=1)
    x = jnp.maximum(x @ p["w2"].T + p["b2"], 0.0)
    return x @ p["w3"].T + p["b3"]


if __name__ == "__main__":
    in_channels, out_channels = 16, 4
    hidden = (64, 64)

    key = jax.random.PRNGKey(0)
    k_s, k_a, k_p, k_s2, k_a2 = jax.random.split(key, 5)

    params = init_params(k_p, in_channels, out_channels, hidden)
    w1_bf, w2_bf, slab = pack_params(params)

    # 1) Small batch -> single-block fused path (BatchNorm1d training mode needs B > 1).
    B = 8
    state = jax.random.normal(k_s, (B, in_channels), jnp.float32)
    action = jax.random.normal(k_a, (B, out_channels), jnp.float32)
    out = jax.block_until_ready(critic_forward(state, action, w1_bf, w2_bf, slab))
    ref = critic_ref(state, action, params)
    assert out.shape == (B, 1), out.shape
    # bf16 MXU operands -> loosened tolerance vs. the f32 reference (review note).
    assert jnp.allclose(out, ref, atol=2e-2, rtol=2e-2), (out, ref)

    # 2) Larger batch -> exercises the two-pass, batch-tiled (parallel-grid) path.
    B2 = 256
    state2 = jax.random.normal(k_s2, (B2, in_channels), jnp.float32)
    action2 = jax.random.normal(k_a2, (B2, out_channels), jnp.float32)
    out2 = jax.block_until_ready(critic_forward(state2, action2, w1_bf, w2_bf, slab))
    ref2 = critic_ref(state2, action2, params)
    assert out2.shape == (B2, 1), out2.shape
    assert jnp.allclose(out2, ref2, atol=2e-2, rtol=2e-2), (out2, ref2)

    print("KERNEL_OK")
</pallas_src>

<mosaic_0001>
module attributes {stable_mosaic.version = 11 : i64} {
  func.func @_fused_kernel(%arg0: memref<8x16xf32, #tpu.memory_space<vmem>>, %arg1: memref<8x4xf32, #tpu.memory_space<vmem>>, %arg2: memref<16x64xbf16, #tpu.memory_space<vmem>>, %arg3: memref<68x64xbf16, #tpu.memory_space<vmem>>, %arg4: memref<8x128xf32, #tpu.memory_space<vmem>>, %arg5: memref<1x8xf32, #tpu.memory_space<vmem>>) attributes {dimension_semantics = [], scalar_prefetch = 0 : i64, scratch_operands = 0 : i64, tpu.core_type = #tpu.core_type<tc>} {
    %c0 = arith.constant 0 : index
    %c0_0 = arith.constant 0 : index
    %0 = vector.load %arg0[%c0, %c0_0] : memref<8x16xf32, #tpu.memory_space<vmem>>, vector<8x16xf32>
    %1 = arith.truncf %0 : vector<8x16xf32> to vector<8x16xbf16>
    %c0_1 = arith.constant 0 : index
    %c0_2 = arith.constant 0 : index
    %2 = vector.load %arg2[%c0_1, %c0_2] : memref<16x64xbf16, #tpu.memory_space<vmem>>, vector<16x64xbf16>
    %cst = arith.constant dense<0.000000e+00> : vector<8x64xf32>
    %3 = tpu.matmul %1, %2, %cst {dimension_numbers = #tpu.dot_dimension_numbers<[1], [0], [0], [1], [0, 0, 1, 1], [], []>} : vector<8x16xbf16>, vector<16x64xbf16>, vector<8x64xf32> -> vector<8x64xf32>
    %cst_3 = arith.constant dense<0.000000e+00> : vector<64xf32>
    %4 = vector.multi_reduction <add>, %3, %cst_3 [0] : vector<8x64xf32> to vector<64xf32>
    %5 = vector.shape_cast %4 : vector<64xf32> to vector<1x64xf32>
    %6 = arith.mulf %3, %3 : vector<8x64xf32>
    %cst_4 = arith.constant dense<0.000000e+00> : vector<64xf32>
    %7 = vector.multi_reduction <add>, %6, %cst_4 [0] : vector<8x64xf32> to vector<64xf32>
    %8 = vector.shape_cast %7 : vector<64xf32> to vector<1x64xf32>
    %cst_5 = arith.constant 1.250000e-01 : f32
    %9 = vector.broadcast %cst_5 : f32 to vector<1x64xf32>
    %10 = arith.mulf %5, %9 : vector<1x64xf32>
    %cst_6 = arith.constant 1.250000e-01 : f32
    %11 = vector.broadcast %cst_6 : f32 to vector<1x64xf32>
    %12 = arith.mulf %8, %11 : vector<1x64xf32>
    %13 = arith.mulf %10, %10 : vector<1x64xf32>
    %14 = arith.subf %12, %13 : vector<1x64xf32>
    %c3 = arith.constant 3 : index
    %c0_7 = arith.constant 0 : index
    %15 = vector.load %arg4[%c3, %c0_7] : memref<8x128xf32, #tpu.memory_space<vmem>>, vector<1x64xf32>
    %cst_8 = arith.constant 9.99999974E-6 : f32
    %16 = vector.broadcast %cst_8 : f32 to vector<1x64xf32>
    %17 = arith.addf %14, %16 : vector<1x64xf32>
    %18 = math.rsqrt %17 : vector<1x64xf32>
    %19 = arith.mulf %15, %18 : vector<1x64xf32>
    %c4 = arith.constant 4 : index
    %c0_9 = arith.constant 0 : index
    %20 = vector.load %arg4[%c4, %c0_9] : memref<8x128xf32, #tpu.memory_space<vmem>>, vector<1x64xf32>
    %21 = arith.mulf %10, %19 : vector<1x64xf32>
    %22 = arith.subf %20, %21 : vector<1x64xf32>
    %23 = vector.broadcast %19 : vector<1x64xf32> to vector<8x64xf32>
    %24 = arith.mulf %3, %23 : vector<8x64xf32>
    %25 = vector.broadcast %22 : vector<1x64xf32> to vector<8x64xf32>
    %26 = arith.addf %24, %25 : vector<8x64xf32>
    %cst_10 = arith.constant 0.000000e+00 : f32
    %27 = vector.broadcast %cst_10 : f32 to vector<8x64xf32>
    %28 = arith.maximumf %26, %27 : vector<8x64xf32>
    %c0_11 = arith.constant 0 : index
    %c0_12 = arith.constant 0 : index
    %29 = vector.load %arg1[%c0_11, %c0_12] : memref<8x4xf32, #tpu.memory_space<vmem>>, vector<8x4xf32>
    %30 = arith.truncf %28 : vector<8x64xf32> to vector<8x64xbf16>
    %c0_13 = arith.constant 0 : index
    %c0_14 = arith.constant 0 : index
    %31 = vector.load %arg3[%c0_13, %c0_14] : memref<68x64xbf16, #tpu.memory_space<vmem>>, vector<64x64xbf16>
    %cst_15 = arith.constant dense<0.000000e+00> : vector<8x64xf32>
    %32 = tpu.matmul %30, %31, %cst_15 {dimension_numbers = #tpu.dot_dimension_numbers<[1], [0], [0], [1], [0, 0, 1, 1], [], []>} : vector<8x64xbf16>, vector<64x64xbf16>, vector<8x64xf32> -> vector<8x64xf32>
    %33 = arith.truncf %29 : vector<8x4xf32> to vector<8x4xbf16>
    %c64 = arith.constant 64 : index
    %c0_16 = arith.constant 0 : index
    %34 = vector.load %arg3[%c64, %c0_16] : memref<68x64xbf16, #tpu.memory_space<vmem>>, vector<4x64xbf16>
    %cst_17 = arith.constant dense<0.000000e+00> : vector<8x64xf32>
    %35 = tpu.matmul %33, %34, %cst_17 {dimension_numbers = #tpu.dot_dimension_numbers<[1], [0], [0], [1], [0, 0, 1, 1], [], []>} : vector<8x4xbf16>, vector<4x64xbf16>, vector<8x64xf32> -> vector<8x64xf32>
    %36 = arith.addf %32, %35 : vector<8x64xf32>
    %c0_18 = arith.constant 0 : index
    %c0_19 = arith.constant 0 : index
    %37 = vector.load %arg4[%c0_18, %c0_19] : memref<8x128xf32, #tpu.memory_space<vmem>>, vector<1x64xf32>
    %38 = vector.broadcast %37 : vector<1x64xf32> to vector<8x64xf32>
    %39 = arith.addf %36, %38 : vector<8x64xf32>
    %cst_20 = arith.constant 0.000000e+00 : f32
    %40 = vector.broadcast %cst_20 : f32 to vector<8x64xf32>
    %41 = arith.maximumf %39, %40 : vector<8x64xf32>
    %c1 = arith.constant 1 : index
    %c0_21 = arith.constant 0 : index
    %42 = vector.load %arg4[%c1, %c0_21] : memref<8x128xf32, #tpu.memory_space<vmem>>, vector<1x64xf32>
    %43 = vector.shape_cast %42 : vector<1x64xf32> to vector<1x64xf32>
    %44 = vector.broadcast %43 : vector<1x64xf32> to vector<8x64xf32>
    %45 = arith.truncf %44 : vector<8x64xf32> to vector<8x64xbf16>
    %46 = arith.truncf %41 : vector<8x64xf32> to vector<8x64xbf16>
    %cst_22 = arith.constant dense<0.000000e+00> : vector<8x8xf32>
    %47 = tpu.matmul %45, %46, %cst_22 {dimension_numbers = #tpu.dot_dimension_numbers<[1], [1], [0], [0], [0, 0, 1, 0], [], []>} : vector<8x64xbf16>, vector<8x64xbf16>, vector<8x8xf32> -> vector<8x8xf32>
    %48 = vector.extract_strided_slice %47 {offsets = [0, 0], sizes = [1, 8], strides = [1, 1]} : vector<8x8xf32> to vector<1x8xf32>
    %c2 = arith.constant 2 : index
    %c0_23 = arith.constant 0 : index
    %49 = vector.load %arg4[%c2, %c0_23] : memref<8x128xf32, #tpu.memory_space<vmem>>, vector<1x1xf32>
    %50 = vector.broadcast %49 : vector<1x1xf32> to vector<1x8xf32>
    %51 = arith.addf %48, %50 : vector<1x8xf32>
    %c0_24 = arith.constant 0 : index
    %c0_25 = arith.constant 0 : index
    %52 = vector.load %arg5[%c0_24, %c0_25] : memref<1x8xf32, #tpu.memory_space<vmem>>, vector<1x8xf32>
    tpu.vector_store %arg5[%c0_24, %c0_25], %51 {strides = array<i32>} : memref<1x8xf32, #tpu.memory_space<vmem>>, vector<1x8xf32>,
    return
  }
}

</mosaic_0001>

<llo_original>
// kernel: critic_forward.1
$region0: #{critic_forward.1}
  #allocation0 [shape = 'u32[]', space=smem, size = 0x4, offset = 0x4, fixed_abs, tag = 'smem constant byte address 0x4 - core index']
  #allocation1 [shape = 'u32[144,128]{1,0:T(1,128)}', space=vmem, size = 0x12000, scoped, tag = 'internal scratch']
  %s0 = inlined_call_operand.vmem [shape: f32[8,16], index: 0, kind: input, shape index: {}]
  %s1 = inlined_call_operand.vmem [shape: f32[8,4], index: 1, kind: input, shape index: {}]
  %s2 = inlined_call_operand.vmem [shape: bf16[16,64], index: 2, kind: input, shape index: {}]
  %s3 = inlined_call_operand.vmem [shape: bf16[68,64], index: 3, kind: input, shape index: {}]
  %s4 = inlined_call_operand.vmem [shape: f32[8,128], index: 4, kind: input, shape index: {}]
  %s5 = inlined_call_operand.hbm [shape: f32[1,8], index: 5, kind: output, shape index: {}]
  %s6 = sld [smem:[#allocation0]]
  $region30: #{critic_forward.1} parent=0
    _
  %s8 = ssub.s32 1, %s6
  %s9 = scalar_select 0, %s8, %s6
  $region1: #{critic_forward.1} parent=0
    #allocation2 [shape = 'u8[512]{0}', space=vmem, size = 0x400, scoped, tag = 'output window, operand 0, single buffered']
    #allocation3 [shape = 's32[1]{0}', space=sflag, size = 0x4, scoped, tag = 'scoped memory for critic_forward.1']
    %10 = vsyncpa [#allocation3], 0
    // Predicated region
    $region2: #{critic_forward.1} parent=1 // pred_check
      _
    $region3: #{critic_forward.1} parent=1 // pred_check_branch
      %12 = sbr.rel (0) target = $region5
    $region4: #{critic_forward.1} parent=1 // pred_region
      _
    $region5: #{critic_forward.1} parent=1 // pred_fallthru
      _
    // Predicated region
    $region6: #{critic_forward.1} parent=1 // pred_check
      _
    $region7: #{critic_forward.1} parent=1 // pred_check_branch
      %14 = sbr.rel (0) target = $region9
    $region8: #{critic_forward.1} parent=1 // pred_region
      _
    $region9: #{critic_forward.1} parent=1 // pred_fallthru
      _
    // Predicated region
    $region10: #{critic_forward.1} parent=1 // pred_check
      _
    $region11: #{critic_forward.1} parent=1 // pred_check_branch
      %16 = sbr.rel (0) target = $region13
    $region12: #{critic_forward.1} parent=1 // pred_region
      _
    $region13: #{critic_forward.1} parent=1 // pred_fallthru
      _
    // Predicated region
    $region14: #{critic_forward.1} parent=1 // pred_check
      _
    $region15: #{critic_forward.1} parent=1 // pred_check_branch
      %18 = sbr.rel (0) target = $region17
    $region16: #{critic_forward.1} parent=1 // pred_region
      _
    $region17: #{critic_forward.1} parent=1 // pred_fallthru
      _
    // Predicated region
    $region18: #{critic_forward.1} parent=1 // pred_check
      _
    $region19: #{critic_forward.1} parent=1 // pred_check_branch
      %20 = sbr.rel (0) target = $region21
    $region20: #{critic_forward.1} parent=1 // pred_region
      _
    $region21: #{critic_forward.1} parent=1 // pred_fallthru
      _
    %v22 = vld [vmem:[%s0] sm:$0xff]
    %v23 = vpack.c.bf16 %v22, %v22
    %v24 = vld [vmem:[%s2] sm:$0xf]
    %v25 = vld [vmem:[%s2 + $0x4] sm:$0xf]
    %v28 = vunpack.c.l.b16 %v24
    %v29 = vunpack.c.l.b16 %v25
    %v30 = vpack.c.b16 %v29, %v28
    %vm32 = vcmask 130048
    %v34 = vsel %vm32, %v23, 0
    %36 = vmatprep.subr.bf16.mxu0 0
    %37 = vmatpush1.bf16.msra.mxu0 %v30
    %38 = vmatprep.subr.bf16.mxu0 0
    %39 = vmatpush1.bf16.msra.mxu0 0
    %40 = vmatprep.subr.bf16.mxu0 0
    %41 = vmatpush1.bf16.msra.mxu0 0
    %42 = vmatprep.subr.bf16.mxu0 0
    %43 = vmatpush1.bf16.msra.mxu0 0
    %44 = vmatprep.subr.bf16.mxu0 0
    %45 = vmatpush1.bf16.msra.mxu0 0
    %46 = vmatprep.subr.bf16.mxu0 0
    %47 = vmatpush1.bf16.msra.mxu0 0
    %48 = vmatprep.subr.bf16.mxu0 0
    %49 = vmatpush1.bf16.msra.mxu0 0
    %50 = vmatprep.subr.bf16.mxu0 0
    %51 = vmatpush1.bf16.msra.mxu0 0
    %52 = vmatprep.subr.bf16.mxu0 0
    %53 = vmatpush1.bf16.msra.mxu0 0
    %54 = vmatprep.subr.bf16.mxu0 0
    %55 = vmatpush1.bf16.msra.mxu0 0
    %56 = vmatprep.subr.bf16.mxu0 0
    %57 = vmatpush1.bf16.msra.mxu0 0
    %58 = vmatprep.subr.bf16.mxu0 0
    %59 = vmatpush1.bf16.msra.mxu0 0
    %60 = vmatprep.subr.bf16.mxu0 0
    %61 = vmatpush1.bf16.msra.mxu0 0
    %62 = vmatprep.subr.bf16.mxu0 0
    %63 = vmatpush1.bf16.msra.mxu0 0
    %64 = vmatprep.subr.bf16.mxu0 0
    %65 = vmatpush1.bf16.msra.mxu0 0
    %66 = vmatprep.subr.bf16.mxu0 0
    %67 = vmatpush1.bf16.msra.mxu0 0
    %68 = vmatprep.mubr.bf16.mxu0 0
    %69 = vmatmul.mubr.bf16.gmra.mrb[0].mxu0 %v34
    %v70 = vpop.f32.mrb[0].mxu0
    %v71 = vadd.f32 0.0, %v70
    %v72 = vpop.f32.mrb[0].mxu0
    %v73 = vpop.f32.mrb[0].mxu0
    %v74 = vpop.f32.mrb[0].mxu0
    %75 = vdwg.mxu0
    %vm76 = vcmask 523264
    %v77 = vsel %vm76, %v71, 0.0
    %v78 = vrot.slane %v77, 4
    %v79 = vadd.f32 %v77, %v78
    %v80 = vrot.slane %v79, 2
    %v81 = vadd.f32 %v79, %v80
    %v82 = vrot.slane %v81, 1
    %v83 = vadd.f32 %v81, %v82
    %v84 = vmul.f32 %v71, %v71
    %v85 = vsel %vm76, %v84, 0.0
    %v86 = vrot.slane %v85, 4
    %v87 = vadd.f32 %v85, %v86
    %v88 = vrot.slane %v87, 2
    %v89 = vadd.f32 %v87, %v88
    %v90 = vrot.slane %v89, 1
    %v91 = vadd.f32 %v89, %v90
    %v92 = vmul.f32 %v83, 0.125
    %v93 = vmul.f32 %v91, 0.125
    %v94 = vmul.f32 %v92, %v92
    %v95 = vsub.f32 %v93, %v94
    %v96 = vld [vmem:[%s4 + $0x3] sm:$0x1]
    %v97 = vadd.f32 %v95, 1e-05
    %v98 = vrsqrt.pop %v97
    %v99 = vmul.f32 %v96, %v98
    %v100 = vld [vmem:[%s4 + $0x4] sm:$0x1]
    %v101 = vmul.f32 %v92, %v99
    %v102 = vsub.f32 %v100, %v101
    %v103 = vlaneseq
    %v104 = vshrl.u32 %v103, 7
    %v105 = vsub.s32 0, %v104
    %v106 = vrot.slane %v99, %v105
    %v107 = vmul.f32 %v71, %v106
    %v108 = vlaneseq
    %v109 = vshrl.u32 %v108, 7
    %v110 = vsub.s32 0, %v109
    %v111 = vrot.slane %v102, %v110
    %v112 = vadd.f32 %v107, %v111
    %v113 = vmax.f32 %v112, 0.0
    %v114 = vld [vmem:[%s1] sm:$0xff]
    %v115 = vpack.c.bf16 %v113, %v113
    %v116 = vld [vmem:[%s3] sm:$0xf]
    %v117 = vld [vmem:[%s3 + $0x4] sm:$0xf]
    %v118 = vld [vmem:[%s3 + $0x8] sm:$0xf]
    %v119 = vld [vmem:[%s3 + $0xc] sm:$0xf]
    %v120 = vld [vmem:[%s3 + $0x10] sm:$0xf]
    %v121 = vld [vmem:[%s3 + $0x14] sm:$0xf]
    %v122 = vld [vmem:[%s3 + $0x18] sm:$0xf]
    %v123 = vld [vmem:[%s3 + $0x1c] sm:$0xf]
    %v124 = vpack.c.bf16 %v114, %v114
    %v125 = vld [vmem:[%s3 + $0x20] sm:$0x3]
    %vm126 = vcmask 31744
    %v128 = vsel %vm126, %v124, 0
    %vm130 = vcmask 1041408
    %v132 = vsel %vm130, %v125, 0
    %134 = vmatprep.subr.bf16.mxu0 0
    %135 = vmatpush1.bf16.msra.mxu0 %v132
    %136 = vmatprep.subr.bf16.mxu0 0
    %137 = vmatpush1.bf16.msra.mxu0 0
    %138 = vmatprep.subr.bf16.mxu0 0
    %139 = vmatpush1.bf16.msra.mxu0 0
    %140 = vmatprep.subr.bf16.mxu0 0
    %141 = vmatpush1.bf16.msra.mxu0 0
    %142 = vmatprep.subr.bf16.mxu0 0
    %143 = vmatpush1.bf16.msra.mxu0 0
    %144 = vmatprep.subr.bf16.mxu0 0
    %145 = vmatpush1.bf16.msra.mxu0 0
    %146 = vmatprep.subr.bf16.mxu0 0
    %147 = vmatpush1.bf16.msra.mxu0 0
    %148 = vmatprep.subr.bf16.mxu0 0
    %149 = vmatpush1.bf16.msra.mxu0 0
    %150 = vmatprep.subr.bf16.mxu0 0
    %151 = vmatpush1.bf16.msra.mxu0 0
    %152 = vmatprep.subr.bf16.mxu0 0
    %153 = vmatpush1.bf16.msra.mxu0 0
    %154 = vmatprep.subr.bf16.mxu0 0
    %155 = vmatpush1.bf16.msra.mxu0 0
    %156 = vmatprep.subr.bf16.mxu0 0
    %157 = vmatpush1.bf16.msra.mxu0 0
    %158 = vmatprep.subr.bf16.mxu0 0
    %159 = vmatpush1.bf16.msra.mxu0 0
    %160 = vmatprep.subr.bf16.mxu0 0
    %161 = vmatpush1.bf16.msra.mxu0 0
    %162 = vmatprep.subr.bf16.mxu0 0
    %163 = vmatpush1.bf16.msra.mxu0 0
    %164 = vmatprep.subr.bf16.mxu0 0
    %165 = vmatpush1.bf16.msra.mxu0 0
    %166 = vmatprep.mubr.bf16.mxu0 0
    %167 = vmatmul.mubr.bf16.gmra.mrb[0].mxu0 %v128
    %v168 = vpop.f32.mrb[0].mxu0
    %v169 = vadd.f32 0.0, %v168
    %v170 = vpop.f32.mrb[0].mxu0
    %v171 = vpop.f32.mrb[0].mxu0
    %v172 = vpop.f32.mrb[0].mxu0
    %173 = vdwg.mxu0
    %v182 = vunpack.c.l.b16 %v116
    %v183 = vunpack.c.l.b16 %v117
    %v184 = vunpack.c.l.b16 %v118
    %v185 = vunpack.c.l.b16 %v119
    %v186 = vunpack.c.l.b16 %v120
    %v187 = vunpack.c.l.b16 %v121
    %v188 = vunpack.c.l.b16 %v122
    %v189 = vunpack.c.l.b16 %v123
    %v190 = vpack.c.b16 %v183, %v182
    %v191 = vpack.c.b16 %v185, %v184
    %v192 = vpack.c.b16 %v187, %v186
    %v193 = vpack.c.b16 %v189, %v188
    %v199 = vsel %vm76, %v115, 0
    %201 = vmatprep.subr.bf16.mxu0 0
    %202 = vmatpush1.bf16.msra.mxu0 %v190
    %203 = vmatprep.subr.bf16.mxu0 0
    %204 = vmatpush1.bf16.msra.mxu0 %v191
    %205 = vmatprep.subr.bf16.mxu0 0
    %206 = vmatpush1.bf16.msra.mxu0 %v192
    %207 = vmatprep.subr.bf16.mxu0 0
    %208 = vmatpush1.bf16.msra.mxu0 %v193
    %209 = vmatprep.subr.bf16.mxu0 0
    %210 = vmatpush1.bf16.msra.mxu0 0
    %211 = vmatprep.subr.bf16.mxu0 0
    %212 = vmatpush1.bf16.msra.mxu0 0
    %213 = vmatprep.subr.bf16.mxu0 0
    %214 = vmatpush1.bf16.msra.mxu0 0
    %215 = vmatprep.subr.bf16.mxu0 0
    %216 = vmatpush1.bf16.msra.mxu0 0
    %217 = vmatprep.subr.bf16.mxu0 0
    %218 = vmatpush1.bf16.msra.mxu0 0
    %219 = vmatprep.subr.bf16.mxu0 0
    %220 = vmatpush1.bf16.msra.mxu0 0
    %221 = vmatprep.subr.bf16.mxu0 0
    %222 = vmatpush1.bf16.msra.mxu0 0
    %223 = vmatprep.subr.bf16.mxu0 0
    %224 = vmatpush1.bf16.msra.mxu0 0
    %225 = vmatprep.subr.bf16.mxu0 0
    %226 = vmatpush1.bf16.msra.mxu0 0
    %227 = vmatprep.subr.bf16.mxu0 0
    %228 = vmatpush1.bf16.msra.mxu0 0
    %229 = vmatprep.subr.bf16.mxu0 0
    %230 = vmatpush1.bf16.msra.mxu0 0
    %231 = vmatprep.subr.bf16.mxu0 0
    %232 = vmatpush1.bf16.msra.mxu0 0
    %233 = vmatprep.mubr.bf16.mxu0 0
    %234 = vmatmul.mubr.bf16.gmra.mrb[0].mxu0 %v199
    %v235 = vpop.f32.mrb[0].mxu0
    %v236 = vadd.f32 %v169, %v235
    %v237 = vpop.f32.mrb[0].mxu0
    %v238 = vpop.f32.mrb[0].mxu0
    %v239 = vpop.f32.mrb[0].mxu0
    %240 = vdwg.mxu0
    %v241 = vld [vmem:[%s4] sm:$0x1]
    %v242 = vlaneseq
    %v243 = vshrl.u32 %v242, 7
    %v244 = vsub.s32 0, %v243
    %v245 = vrot.slane %v241, %v244
    %v246 = vadd.f32 %v236, %v245
    %v247 = vmax.f32 %v246, 0.0
    %v248 = vld [vmem:[%s4 + $0x1] sm:$0x1]
    %v249 = vlaneseq
    %v250 = vshrl.u32 %v249, 7
    %v251 = vsub.s32 0, %v250
    %v252 = vrot.slane %v248, %v251
    %v253 = vpack.c.bf16 %v252, %v252
    %v254 = vpack.c.bf16 %v247, %v247
    %v256 = vsel %vm76, %v253, 0
    %v259 = vsel %vm76, %v254, 0
    %261 = vmatprep.subr.bf16.mxu0 0
    %262 = vmatpush1.bf16.xpose.msra.mxu0 %v259
    %263 = vmatprep.subr.bf16.mxu0 0
    %264 = vmatpush1.bf16.xpose.msra.mxu0 0
    %265 = vmatprep.subr.bf16.mxu0 0
    %266 = vmatpush1.bf16.xpose.msra.mxu0 0
    %267 = vmatprep.subr.bf16.mxu0 0
    %268 = vmatpush1.bf16.xpose.msra.mxu0 0
    %269 = vmatprep.subr.bf16.mxu0 0
    %270 = vmatpush1.bf16.xpose.msra.mxu0 0
    %271 = vmatprep.subr.bf16.mxu0 0
    %272 = vmatpush1.bf16.xpose.msra.mxu0 0
    %273 = vmatprep.subr.bf16.mxu0 0
    %274 = vmatpush1.bf16.xpose.msra.mxu0 0
    %275 = vmatprep.subr.bf16.mxu0 0
    %276 = vmatpush1.bf16.xpose.msra.mxu0 0
    %277 = vmatprep.subr.bf16.mxu0 0
    %278 = vmatpush1.bf16.xpose.msra.mxu0 0
    %279 = vmatprep.subr.bf16.mxu0 0
    %280 = vmatpush1.bf16.xpose.msra.mxu0 0
    %281 = vmatprep.subr.bf16.mxu0 0
    %282 = vmatpush1.bf16.xpose.msra.mxu0 0
    %283 = vmatprep.subr.bf16.mxu0 0
    %284 = vmatpush1.bf16.xpose.msra.mxu0 0
    %285 = vmatprep.subr.bf16.mxu0 0
    %286 = vmatpush1.bf16.xpose.msra.mxu0 0
    %287 = vmatprep.subr.bf16.mxu0 0
    %288 = vmatpush1.bf16.xpose.msra.mxu0 0
    %289 = vmatprep.subr.bf16.mxu0 0
    %290 = vmatpush1.bf16.xpose.msra.mxu0 0
    %291 = vmatprep.subr.bf16.mxu0 0
    %292 = vmatpush1.bf16.xpose.msra.mxu0 0
    %293 = vmatprep.mubr.bf16.mxu0 0
    %294 = vmatmul.mubr.bf16.gmra.mrb[0].mxu0 %v256
    %v295 = vpop.f32.mrb[0].mxu0
    %v296 = vadd.f32 0.0, %v295
    %v297 = vpop.f32.mrb[0].mxu0
    %v298 = vpop.f32.mrb[0].mxu0
    %v299 = vpop.f32.mrb[0].mxu0
    %300 = vdwg.mxu0
    %v301 = vld [vmem:[%s4 + $0x2] sm:$0x1]
    %303 = vset.pattern.permute.xlu0 0
    %304 = vperm.xlu0 %303, %v301
    %v305 = vpop.permute.xlu0 %304
    %v307 = vadd.f32 %v296, %v305
    %vm308 = vcmask 57344
    %309 = vst.msk [vmem:[#allocation2] sm:$0x1] %vm308, %v307
    // Predicated region
    $region22: #{critic_forward.1} parent=1 // pred_check
      _
    $region23: #{critic_forward.1} parent=1 // pred_check_branch
      %311 = sbr.rel (0) target = $region25
    $region24: #{critic_forward.1} parent=1 // pred_region
      %s313 = ssub.s32 16, 16
      %314 = vsyncadd [#allocation3], %s313
      %s316 = sshll.u32 [#allocation2], 4
      %s317 = int_to_ptr.vmem [resolvable:$true] %s316
      %319 = dma.vmem_to_hbm [thread:$0]  %s317, 16, %s5, [#allocation3]
    $region25: #{critic_forward.1} parent=1 // pred_fallthru
      _
    // Predicated region
    $region26: #{critic_forward.1} parent=1 // pred_check
      _
    $region27: #{critic_forward.1} parent=1 // pred_check_branch
      %321 = sbr.rel (0) target = $region29
    $region28: #{critic_forward.1} parent=1 // pred_region
      %322 = dma.done [#allocation3], 16
    $region29: #{critic_forward.1} parent=1 // pred_fallthru
      _
    %323 = vsyncpa [#allocation3], 1

</llo_original>
